<compile_context>
chip_gen: v7x
topology: tpu7x:2x2x1
jax: 0.10.0
libtpu: 0.0.40
codegen_flags: <defaults>
</compile_context>

<pallas_src>
import functools

import jax
import jax.numpy as jnp
from jax.experimental import pallas as pl
from jax.experimental.pallas import tpu as pltpu


def _round_up(x, m):
    return (x + m - 1) // m * m


def _pick_batch_tile(b_pad):
    """Largest sublane-aligned tile <= 512 with modest batch over-padding."""
    for tb in (512, 256, 128, 64, 32, 16, 8):
        if tb > b_pad:
            continue
        waste = _round_up(b_pad, tb) - b_pad
        if waste <= max(8, b_pad // 8):
            return tb
    return 8


def _action_net_kernel(ls_ref, lns_ref,
                       w1a_ref, w1b_ref, b1_ref,
                       w2_ref, b2_ref,
                       w3_ref, b3_ref,
                       w4_ref, b4_ref,
                       o_ref):
    # Layer 1: split matmul replaces concat([ls, lns], -1) @ W1.
    h = jnp.dot(ls_ref[...], w1a_ref[...], preferred_element_type=jnp.float32)
    h = h + jnp.dot(lns_ref[...], w1b_ref[...],
                    preferred_element_type=jnp.float32)
    h = jnp.maximum(h + b1_ref[...], 0.0)                       # f32 epilogue

    # Layer 2
    h = jnp.dot(h.astype(jnp.bfloat16), w2_ref[...],
                preferred_element_type=jnp.float32)
    h = jnp.maximum(h + b2_ref[...], 0.0)

    # Layer 3
    h = jnp.dot(h.astype(jnp.bfloat16), w3_ref[...],
                preferred_element_type=jnp.float32)
    h = jnp.maximum(h + b3_ref[...], 0.0)

    # Layer 4 (no activation), lane-dense (padded) output store.
    y = jnp.dot(h.astype(jnp.bfloat16), w4_ref[...],
                preferred_element_type=jnp.float32)
    o_ref[...] = (y + b4_ref[...]).astype(o_ref.dtype)


@functools.partial(jax.jit, static_argnames=("action_dim",))
def action_network_forward(ls, lns, prepared, *, action_dim):
    """ls, lns: (B, latent_dim) float; prepared: output of prepare_params."""
    (w1a, w1b, b1, w2, b2, w3, b3, w4, b4) = prepared
    batch, latent_dim = ls.shape
    out_pad = w4.shape[1]

    # bf16 MXU inputs (accumulation stays f32 inside the kernel).
    ls = ls.astype(jnp.bfloat16)
    lns = lns.astype(jnp.bfloat16)

    # Batch tiling: sublane-aligned, capped at 512, low over-padding.
    b_pad = _round_up(batch, 8)
    tb = _pick_batch_tile(b_pad)
    b_pad = _round_up(b_pad, tb)
    if b_pad != batch:
        pad = b_pad - batch
        ls = jnp.pad(ls, ((0, pad), (0, 0)))
        lns = jnp.pad(lns, ((0, pad), (0, 0)))

    grid = (b_pad // tb,)

    def act_spec(feat):
        return pl.BlockSpec((tb, feat), lambda i: (i, 0))

    def full_spec(arr):
        return pl.BlockSpec(arr.shape, lambda i: (0, 0))

    out = pl.pallas_call(
        _action_net_kernel,
        out_shape=jax.ShapeDtypeStruct((b_pad, out_pad), jnp.float32),
        grid=grid,
        in_specs=[act_spec(latent_dim), act_spec(latent_dim),
                  full_spec(w1a), full_spec(w1b), full_spec(b1),
                  full_spec(w2), full_spec(b2),
                  full_spec(w3), full_spec(b3),
                  full_spec(w4), full_spec(b4)],
        out_specs=pl.BlockSpec((tb, out_pad), lambda i: (i, 0)),
        compiler_params=pltpu.CompilerParams(
            dimension_semantics=("parallel",)),
    )(ls, lns, w1a, w1b, b1, w2, b2, w3, b3, w4, b4)

    return out[:batch, :action_dim]


def init_params(key, latent_dim, action_dim):
    """nn.Linear-style init; weights stored transposed as (fan_in, fan_out)."""
    dims = [(latent_dim * 2, latent_dim),
            (latent_dim, latent_dim),
            (latent_dim, 256),
            (256, action_dim)]
    params = []
    for fan_in, fan_out in dims:
        key, kw, kb = jax.random.split(key, 3)
        bound = 1.0 / float(fan_in) ** 0.5
        w = jax.random.uniform(kw, (fan_in, fan_out), jnp.float32, -bound, bound)
        b = jax.random.uniform(kb, (1, fan_out), jnp.float32, -bound, bound)
        params.append((w, b))
    return tuple(params)


def prepare_params(params, latent_dim, action_dim):
    """Split W1, zero-pad feature widths to multiples of 128, cast W to bf16."""
    (w1, b1), (w2, b2), (w3, b3), (w4, b4) = params
    hp = _round_up(latent_dim, 128)   # lane-dense hidden width
    ap = _round_up(action_dim, 128)   # lane-dense output width

    def pad_to(a, rows, cols):
        return jnp.pad(a, ((0, rows - a.shape[0]), (0, cols - a.shape[1])))

    w1a = pad_to(w1[:latent_dim], latent_dim, hp).astype(jnp.bfloat16)
    w1b = pad_to(w1[latent_dim:], latent_dim, hp).astype(jnp.bfloat16)
    b1p = pad_to(b1, 1, hp)                                    # f32 bias
    w2p = pad_to(w2, hp, hp).astype(jnp.bfloat16)
    b2p = pad_to(b2, 1, hp)
    w3p = pad_to(w3, hp, 256).astype(jnp.bfloat16)
    b3p = b3
    w4p = pad_to(w4, 256, ap).astype(jnp.bfloat16)
    b4p = pad_to(b4, 1, ap)
    return (w1a, w1b, b1p, w2p, b2p, w3p, b3p, w4p, b4p)


def reference_forward_f32(ls, lns, params):
    x = jnp.concatenate([ls, lns], axis=-1)
    (w1, b1), (w2, b2), (w3, b3), (w4, b4) = params
    h = jnp.maximum(x @ w1 + b1, 0.0)
    h = jnp.maximum(h @ w2 + b2, 0.0)
    h = jnp.maximum(h @ w3 + b3, 0.0)
    return h @ w4 + b4


def reference_forward_bf16(ls, lns, params):
    """Emulates kernel numerics: bf16 matmul inputs, f32 accumulation."""
    (w1, b1), (w2, b2), (w3, b3), (w4, b4) = params

    def mm(x, w):
        return jnp.dot(x.astype(jnp.bfloat16), w.astype(jnp.bfloat16),
                       preferred_element_type=jnp.float32)

    x = jnp.concatenate([ls, lns], axis=-1)
    h = jnp.maximum(mm(x, w1) + b1, 0.0)
    h = jnp.maximum(mm(h, w2) + b2, 0.0)
    h = jnp.maximum(mm(h, w3) + b3, 0.0)
    return mm(h, w4) + b4


if __name__ == "__main__":
    latent_dim = 32
    action_dim = 8
    batch = 8

    key = jax.random.PRNGKey(0)
    k_ls, k_lns, k_params = jax.random.split(key, 3)

    ls = jax.random.normal(k_ls, (batch, latent_dim), jnp.float32)
    lns = jax.random.normal(k_lns, (batch, latent_dim), jnp.float32)
    params = init_params(k_params, latent_dim, action_dim)
    prepared = prepare_params(params, latent_dim, action_dim)

    out = action_network_forward(ls, lns, prepared, action_dim=action_dim)
    out = jax.block_until_ready(out)
    assert out.shape == (batch, action_dim)

    # Matches the bf16-input / f32-accumulate numerics tightly ...
    ref_bf16 = reference_forward_bf16(ls, lns, params)
    assert jnp.allclose(out, ref_bf16, atol=1e-3, rtol=1e-3)
    # ... and the pure-f32 PyTorch semantics within bf16 quantization error.
    ref_f32 = reference_forward_f32(ls, lns, params)
    assert jnp.allclose(out, ref_f32, atol=5e-2, rtol=5e-2)

    print("KERNEL_OK")
</pallas_src>

<mosaic_0001>
module attributes {stable_mosaic.version = 11 : i64} {
  func.func @_action_net_kernel(%arg0: i32, %arg1: memref<8x32xbf16, #tpu.memory_space<vmem>>, %arg2: memref<8x32xbf16, #tpu.memory_space<vmem>>, %arg3: memref<32x128xbf16, #tpu.memory_space<vmem>>, %arg4: memref<32x128xbf16, #tpu.memory_space<vmem>>, %arg5: memref<1x128xf32, #tpu.memory_space<vmem>>, %arg6: memref<128x128xbf16, #tpu.memory_space<vmem>>, %arg7: memref<1x128xf32, #tpu.memory_space<vmem>>, %arg8: memref<128x256xbf16, #tpu.memory_space<vmem>>, %arg9: memref<1x256xf32, #tpu.memory_space<vmem>>, %arg10: memref<256x128xbf16, #tpu.memory_space<vmem>>, %arg11: memref<1x128xf32, #tpu.memory_space<vmem>>, %arg12: memref<8x128xf32, #tpu.memory_space<vmem>>) attributes {dimension_semantics = [#tpu.dimension_semantics<parallel>], iteration_bounds = array<i64: 1>, scalar_prefetch = 0 : i64, scratch_operands = 0 : i64, tpu.core_type = #tpu.core_type<tc>, window_params = [{transform_indices = @transform_0, window_bounds = array<i64: 8, 32>}, {transform_indices = @transform_1, window_bounds = array<i64: 8, 32>}, {pipeline_mode = #tpu.pipeline_mode<synchronous>, transform_indices = @transform_2, window_bounds = array<i64: 32, 128>}, {pipeline_mode = #tpu.pipeline_mode<synchronous>, transform_indices = @transform_3, window_bounds = array<i64: 32, 128>}, {pipeline_mode = #tpu.pipeline_mode<synchronous>, transform_indices = @transform_4, window_bounds = array<i64: 1, 128>}, {pipeline_mode = #tpu.pipeline_mode<synchronous>, transform_indices = @transform_5, window_bounds = array<i64: 128, 128>}, {pipeline_mode = #tpu.pipeline_mode<synchronous>, transform_indices = @transform_6, window_bounds = array<i64: 1, 128>}, {pipeline_mode = #tpu.pipeline_mode<synchronous>, transform_indices = @transform_7, window_bounds = array<i64: 128, 256>}, {pipeline_mode = #tpu.pipeline_mode<synchronous>, transform_indices = @transform_8, window_bounds = array<i64: 1, 256>}, {pipeline_mode = #tpu.pipeline_mode<synchronous>, transform_indices = @transform_9, window_bounds = array<i64: 256, 128>}, {pipeline_mode = #tpu.pipeline_mode<synchronous>, transform_indices = @transform_10, window_bounds = array<i64: 1, 128>}, {transform_indices = @transform_11, window_bounds = array<i64: 8, 128>}]} {
    %c0 = arith.constant 0 : index
    %c0_0 = arith.constant 0 : index
    %0 = vector.load %arg1[%c0, %c0_0] : memref<8x32xbf16, #tpu.memory_space<vmem>>, vector<8x32xbf16>
    %c0_1 = arith.constant 0 : index
    %c0_2 = arith.constant 0 : index
    %1 = vector.load %arg3[%c0_1, %c0_2] : memref<32x128xbf16, #tpu.memory_space<vmem>>, vector<32x128xbf16>
    %cst = arith.constant dense<0.000000e+00> : vector<8x128xf32>
    %2 = tpu.matmul %0, %1, %cst {dimension_numbers = #tpu.dot_dimension_numbers<[1], [0], [0], [1], [0, 0, 1, 1], [], []>} : vector<8x32xbf16>, vector<32x128xbf16>, vector<8x128xf32> -> vector<8x128xf32>
    %c0_3 = arith.constant 0 : index
    %c0_4 = arith.constant 0 : index
    %3 = vector.load %arg2[%c0_3, %c0_4] : memref<8x32xbf16, #tpu.memory_space<vmem>>, vector<8x32xbf16>
    %c0_5 = arith.constant 0 : index
    %c0_6 = arith.constant 0 : index
    %4 = vector.load %arg4[%c0_5, %c0_6] : memref<32x128xbf16, #tpu.memory_space<vmem>>, vector<32x128xbf16>
    %cst_7 = arith.constant dense<0.000000e+00> : vector<8x128xf32>
    %5 = tpu.matmul %3, %4, %cst_7 {dimension_numbers = #tpu.dot_dimension_numbers<[1], [0], [0], [1], [0, 0, 1, 1], [], []>} : vector<8x32xbf16>, vector<32x128xbf16>, vector<8x128xf32> -> vector<8x128xf32>
    %6 = arith.addf %2, %5 : vector<8x128xf32>
    %c0_8 = arith.constant 0 : index
    %c0_9 = arith.constant 0 : index
    %7 = vector.load %arg5[%c0_8, %c0_9] : memref<1x128xf32, #tpu.memory_space<vmem>>, vector<1x128xf32>
    %8 = vector.broadcast %7 : vector<1x128xf32> to vector<8x128xf32>
    %9 = arith.addf %6, %8 : vector<8x128xf32>
    %cst_10 = arith.constant 0.000000e+00 : f32
    %10 = vector.broadcast %cst_10 : f32 to vector<8x128xf32>
    %11 = arith.maximumf %9, %10 : vector<8x128xf32>
    %12 = arith.truncf %11 : vector<8x128xf32> to vector<8x128xbf16>
    %c0_11 = arith.constant 0 : index
    %c0_12 = arith.constant 0 : index
    %13 = vector.load %arg6[%c0_11, %c0_12] : memref<128x128xbf16, #tpu.memory_space<vmem>>, vector<128x128xbf16>
    %cst_13 = arith.constant dense<0.000000e+00> : vector<8x128xf32>
    %14 = tpu.matmul %12, %13, %cst_13 {dimension_numbers = #tpu.dot_dimension_numbers<[1], [0], [0], [1], [0, 0, 1, 1], [], []>} : vector<8x128xbf16>, vector<128x128xbf16>, vector<8x128xf32> -> vector<8x128xf32>
    %c0_14 = arith.constant 0 : index
    %c0_15 = arith.constant 0 : index
    %15 = vector.load %arg7[%c0_14, %c0_15] : memref<1x128xf32, #tpu.memory_space<vmem>>, vector<1x128xf32>
    %16 = vector.broadcast %15 : vector<1x128xf32> to vector<8x128xf32>
    %17 = arith.addf %14, %16 : vector<8x128xf32>
    %cst_16 = arith.constant 0.000000e+00 : f32
    %18 = vector.broadcast %cst_16 : f32 to vector<8x128xf32>
    %19 = arith.maximumf %17, %18 : vector<8x128xf32>
    %20 = arith.truncf %19 : vector<8x128xf32> to vector<8x128xbf16>
    %c0_17 = arith.constant 0 : index
    %c0_18 = arith.constant 0 : index
    %21 = vector.load %arg8[%c0_17, %c0_18] : memref<128x256xbf16, #tpu.memory_space<vmem>>, vector<128x256xbf16>
    %cst_19 = arith.constant dense<0.000000e+00> : vector<8x256xf32>
    %22 = tpu.matmul %20, %21, %cst_19 {dimension_numbers = #tpu.dot_dimension_numbers<[1], [0], [0], [1], [0, 0, 1, 1], [], []>} : vector<8x128xbf16>, vector<128x256xbf16>, vector<8x256xf32> -> vector<8x256xf32>
    %c0_20 = arith.constant 0 : index
    %c0_21 = arith.constant 0 : index
    %23 = vector.load %arg9[%c0_20, %c0_21] : memref<1x256xf32, #tpu.memory_space<vmem>>, vector<1x256xf32>
    %24 = vector.broadcast %23 : vector<1x256xf32> to vector<8x256xf32>
    %25 = arith.addf %22, %24 : vector<8x256xf32>
    %cst_22 = arith.constant 0.000000e+00 : f32
    %26 = vector.broadcast %cst_22 : f32 to vector<8x256xf32>
    %27 = arith.maximumf %25, %26 : vector<8x256xf32>
    %28 = arith.truncf %27 : vector<8x256xf32> to vector<8x256xbf16>
    %c0_23 = arith.constant 0 : index
    %c0_24 = arith.constant 0 : index
    %29 = vector.load %arg10[%c0_23, %c0_24] : memref<256x128xbf16, #tpu.memory_space<vmem>>, vector<256x128xbf16>
    %cst_25 = arith.constant dense<0.000000e+00> : vector<8x128xf32>
    %30 = tpu.matmul %28, %29, %cst_25 {dimension_numbers = #tpu.dot_dimension_numbers<[1], [0], [0], [1], [0, 0, 1, 1], [], []>} : vector<8x256xbf16>, vector<256x128xbf16>, vector<8x128xf32> -> vector<8x128xf32>
    %c0_26 = arith.constant 0 : index
    %c0_27 = arith.constant 0 : index
    %31 = vector.load %arg11[%c0_26, %c0_27] : memref<1x128xf32, #tpu.memory_space<vmem>>, vector<1x128xf32>
    %32 = vector.broadcast %31 : vector<1x128xf32> to vector<8x128xf32>
    %33 = arith.addf %30, %32 : vector<8x128xf32>
    %c0_28 = arith.constant 0 : index
    %c0_29 = arith.constant 0 : index
    %34 = vector.load %arg12[%c0_28, %c0_29] : memref<8x128xf32, #tpu.memory_space<vmem>>, vector<8x128xf32>
    tpu.vector_store %arg12[%c0_28, %c0_29], %33 {strides = array<i32>} : memref<8x128xf32, #tpu.memory_space<vmem>>, vector<8x128xf32>,
    return
  }
  func.func @transform_0(%arg0: i32) -> (i32, i32) {
    %c0_i32 = arith.constant 0 : i32
    %c0_i32_0 = arith.constant 0 : i32
    return %arg0, %c0_i32 : i32, i32
  }
  func.func @transform_1(%arg0: i32) -> (i32, i32) {
    %c0_i32 = arith.constant 0 : i32
    %c0_i32_0 = arith.constant 0 : i32
    return %arg0, %c0_i32 : i32, i32
  }
  func.func @transform_2(%arg0: i32) -> (i32, i32) {
    %c0_i32 = arith.constant 0 : i32
    %c0_i32_0 = arith.constant 0 : i32
    %c0_i32_1 = arith.constant 0 : i32
    return %c0_i32, %c0_i32_0 : i32, i32
  }
  func.func @transform_3(%arg0: i32) -> (i32, i32) {
    %c0_i32 = arith.constant 0 : i32
    %c0_i32_0 = arith.constant 0 : i32
    %c0_i32_1 = arith.constant 0 : i32
    return %c0_i32, %c0_i32_0 : i32, i32
  }
  func.func @transform_4(%arg0: i32) -> (i32, i32) {
    %c0_i32 = arith.constant 0 : i32
    %c0_i32_0 = arith.constant 0 : i32
    %c0_i32_1 = arith.constant 0 : i32
    return %c0_i32, %c0_i32_0 : i32, i32
  }
  func.func @transform_5(%arg0: i32) -> (i32, i32) {
    %c0_i32 = arith.constant 0 : i32
    %c0_i32_0 = arith.constant 0 : i32
    %c0_i32_1 = arith.constant 0 : i32
    return %c0_i32, %c0_i32_0 : i32, i32
  }
  func.func @transform_6(%arg0: i32) -> (i32, i32) {
    %c0_i32 = arith.constant 0 : i32
    %c0_i32_0 = arith.constant 0 : i32
    %c0_i32_1 = arith.constant 0 : i32
    return %c0_i32, %c0_i32_0 : i32, i32
  }
  func.func @transform_7(%arg0: i32) -> (i32, i32) {
    %c0_i32 = arith.constant 0 : i32
    %c0_i32_0 = arith.constant 0 : i32
    %c0_i32_1 = arith.constant 0 : i32
    return %c0_i32, %c0_i32_0 : i32, i32
  }
  func.func @transform_8(%arg0: i32) -> (i32, i32) {
    %c0_i32 = arith.constant 0 : i32
    %c0_i32_0 = arith.constant 0 : i32
    %c0_i32_1 = arith.constant 0 : i32
    return %c0_i32, %c0_i32_0 : i32, i32
  }
  func.func @transform_9(%arg0: i32) -> (i32, i32) {
    %c0_i32 = arith.constant 0 : i32
    %c0_i32_0 = arith.constant 0 : i32
    %c0_i32_1 = arith.constant 0 : i32
    return %c0_i32, %c0_i32_0 : i32, i32
  }
  func.func @transform_10(%arg0: i32) -> (i32, i32) {
    %c0_i32 = arith.constant 0 : i32
    %c0_i32_0 = arith.constant 0 : i32
    %c0_i32_1 = arith.constant 0 : i32
    return %c0_i32, %c0_i32_0 : i32, i32
  }
  func.func @transform_11(%arg0: i32) -> (i32, i32) {
    %c0_i32 = arith.constant 0 : i32
    %c0_i32_0 = arith.constant 0 : i32
    return %arg0, %c0_i32 : i32, i32
  }
}

</mosaic_0001>

<llo_original>
// kernel: action_network_forward.1
$region0: #{action_network_forward.1}
  #allocation0 [shape = 'u32[]', space=smem, size = 0x4, offset = 0x4, fixed_abs, tag = 'smem constant byte address 0x4 - core index']
  #allocation1 [shape = 'u32[144,128]{1,0:T(1,128)}', space=vmem, size = 0x12000, scoped, tag = 'internal scratch']
  %s0 = inlined_call_operand.vmem [shape: bf16[8,32], index: 0, kind: input, shape index: {}]
  %s1 = inlined_call_operand.vmem [shape: bf16[8,32], index: 1, kind: input, shape index: {}]
  %s2 = inlined_call_operand.vmem [shape: bf16[32,128], index: 2, kind: input, shape index: {}]
  %s3 = inlined_call_operand.vmem [shape: bf16[32,128], index: 3, kind: input, shape index: {}]
  %s4 = inlined_call_operand.vmem [shape: f32[1,128], index: 4, kind: input, shape index: {}]
  %s5 = inlined_call_operand.hbm [shape: bf16[128,128], index: 5, kind: input, shape index: {}]
  %s6 = inlined_call_operand.vmem [shape: f32[1,128], index: 6, kind: input, shape index: {}]
  %s7 = inlined_call_operand.hbm [shape: bf16[128,256], index: 7, kind: input, shape index: {}]
  %s8 = inlined_call_operand.vmem [shape: f32[1,256], index: 8, kind: input, shape index: {}]
  %s9 = inlined_call_operand.hbm [shape: bf16[256,128], index: 9, kind: input, shape index: {}]
  %s10 = inlined_call_operand.vmem [shape: f32[1,128], index: 10, kind: input, shape index: {}]
  %s11 = inlined_call_operand.hbm [shape: f32[8,128], index: 11, kind: output, shape index: {}]
  %s12 = sld [smem:[#allocation0]]
  $region66: #{action_network_forward.1} parent=0
    _
  %s14 = ssub.s32 1, %s12
  %s15 = scalar_select 0, %s14, %s12
  $region1: #{action_network_forward.1} parent=0
    #allocation2 [shape = 'u8[32768]{0}', space=vmem, size = 0x8000, scoped, tag = 'input window, operand 5, single buffered']
    #allocation3 [shape = 's32[1]{0}', space=sflag, size = 0x4, scoped, tag = 'scoped memory for action_network_forward.1']
    #allocation4 [shape = 's32[1]{0}', space=sflag, size = 0x4, scoped, tag = 'scoped memory for action_network_forward.1']
    #allocation5 [shape = 'u8[65536]{0}', space=vmem, size = 0x10000, scoped, tag = 'input window, operand 7, single buffered']
    #allocation6 [shape = 's32[1]{0}', space=sflag, size = 0x4, scoped, tag = 'scoped memory for action_network_forward.1']
    #allocation7 [shape = 'u8[65536]{0}', space=vmem, size = 0x10000, scoped, tag = 'input window, operand 9, single buffered']
    #allocation8 [shape = 'u8[4096]{0}', space=vmem, size = 0x1000, scoped, tag = 'output window, operand 0, single buffered']
    %16 = vsyncpa [#allocation3], 0
    %17 = vsyncpa [#allocation6], 0
    %18 = vsyncpa [#allocation4], 0
    // Predicated region
    $region2: #{action_network_forward.1} parent=1 // pred_check
      _
    $region3: #{action_network_forward.1} parent=1 // pred_check_branch
      %20 = sbr.rel (0) target = $region5
    $region4: #{action_network_forward.1} parent=1 // pred_region
      _
    $region5: #{action_network_forward.1} parent=1 // pred_fallthru
      _
    // Predicated region
    $region6: #{action_network_forward.1} parent=1 // pred_check
      _
    $region7: #{action_network_forward.1} parent=1 // pred_check_branch
      %22 = sbr.rel (0) target = $region9
    $region8: #{action_network_forward.1} parent=1 // pred_region
      _
    $region9: #{action_network_forward.1} parent=1 // pred_fallthru
      _
    // Predicated region
    $region10: #{action_network_forward.1} parent=1 // pred_check
      _
    $region11: #{action_network_forward.1} parent=1 // pred_check_branch
      %24 = sbr.rel (0) target = $region13
    $region12: #{action_network_forward.1} parent=1 // pred_region
      _
    $region13: #{action_network_forward.1} parent=1 // pred_fallthru
      _
    // Predicated region
    $region14: #{action_network_forward.1} parent=1 // pred_check
      _
    $region15: #{action_network_forward.1} parent=1 // pred_check_branch
      %26 = sbr.rel (0) target = $region17
    $region16: #{action_network_forward.1} parent=1 // pred_region
      _
    $region17: #{action_network_forward.1} parent=1 // pred_fallthru
      _
    // Predicated region
    $region18: #{action_network_forward.1} parent=1 // pred_check
      _
    $region19: #{action_network_forward.1} parent=1 // pred_check_branch
      %28 = sbr.rel (0) target = $region21
    $region20: #{action_network_forward.1} parent=1 // pred_region
      _
    $region21: #{action_network_forward.1} parent=1 // pred_fallthru
      _
    // Predicated region
    $region22: #{action_network_forward.1} parent=1 // pred_check
      _
    $region23: #{action_network_forward.1} parent=1 // pred_check_branch
      %30 = sbr.rel (0) target = $region25
    $region24: #{action_network_forward.1} parent=1 // pred_region
      %s32 = ssub.s32 1024, 1024
      %33 = vsyncadd [#allocation3], %s32
      %s34 = sshll.u32 [#allocation2], 4
      %s35 = int_to_ptr.vmem [resolvable:$true] %s34
      %40 = dma.hbm_to_vmem [thread:$0]  %s5, 1024, %s35, [#allocation3], 64, 64, 4
    $region25: #{action_network_forward.1} parent=1 // pred_fallthru
      _
    // Predicated region
    $region26: #{action_network_forward.1} parent=1 // pred_check
      _
    $region27: #{action_network_forward.1} parent=1 // pred_check_branch
      %42 = sbr.rel (0) target = $region29
    $region28: #{action_network_forward.1} parent=1 // pred_region
      _
    $region29: #{action_network_forward.1} parent=1 // pred_fallthru
      _
    // Predicated region
    $region30: #{action_network_forward.1} parent=1 // pred_check
      _
    $region31: #{action_network_forward.1} parent=1 // pred_check_branch
      %44 = sbr.rel (0) target = $region33
    $region32: #{action_network_forward.1} parent=1 // pred_region
      %s46 = ssub.s32 2048, 2048
      %47 = vsyncadd [#allocation6], %s46
      %s48 = sshll.u32 [#allocation5], 4
      %s49 = int_to_ptr.vmem [resolvable:$true] %s48
      %54 = dma.hbm_to_vmem [thread:$0]  %s7, 2048, %s49, [#allocation6], 128, 128, 8
    $region33: #{action_network_forward.1} parent=1 // pred_fallthru
      _
    // Predicated region
    $region34: #{action_network_forward.1} parent=1 // pred_check
      _
    $region35: #{action_network_forward.1} parent=1 // pred_check_branch
      %56 = sbr.rel (0) target = $region37
    $region36: #{action_network_forward.1} parent=1 // pred_region
      _
    $region37: #{action_network_forward.1} parent=1 // pred_fallthru
      _
    // Predicated region
    $region38: #{action_network_forward.1} parent=1 // pred_check
      _
    $region39: #{action_network_forward.1} parent=1 // pred_check_branch
      %58 = sbr.rel (0) target = $region41
    $region40: #{action_network_forward.1} parent=1 // pred_region
      %s60 = ssub.s32 2048, 2048
      %61 = vsyncadd [#allocation6], %s60
      %s62 = sshll.u32 [#allocation7], 4
      %s63 = int_to_ptr.vmem [resolvable:$true] %s62
      %68 = dma.hbm_to_vmem [thread:$0]  %s9, 2048, %s63, [#allocation6], 64, 64, 4
    $region41: #{action_network_forward.1} parent=1 // pred_fallthru
      _
    // Predicated region
    $region42: #{action_network_forward.1} parent=1 // pred_check
      _
    $region43: #{action_network_forward.1} parent=1 // pred_check_branch
      %70 = sbr.rel (0) target = $region45
    $region44: #{action_network_forward.1} parent=1 // pred_region
      _
    $region45: #{action_network_forward.1} parent=1 // pred_fallthru
      _
    // Predicated region
    $region46: #{action_network_forward.1} parent=1 // pred_check
      _
    $region47: #{action_network_forward.1} parent=1 // pred_check_branch
      %72 = sbr.rel (0) target = $region49
    $region48: #{action_network_forward.1} parent=1 // pred_region
      %73 = dma.done [#allocation3], 1024
    $region49: #{action_network_forward.1} parent=1 // pred_fallthru
      _
    // Predicated region
    $region50: #{action_network_forward.1} parent=1 // pred_check
      _
    $region51: #{action_network_forward.1} parent=1 // pred_check_branch
      %75 = sbr.rel (0) target = $region53
    $region52: #{action_network_forward.1} parent=1 // pred_region
      %76 = dma.done [#allocation6], 2048
    $region53: #{action_network_forward.1} parent=1 // pred_fallthru
      _
    // Predicated region
    $region54: #{action_network_forward.1} parent=1 // pred_check
      _
    $region55: #{action_network_forward.1} parent=1 // pred_check_branch
      %78 = sbr.rel (0) target = $region57
    $region56: #{action_network_forward.1} parent=1 // pred_region
      %79 = dma.done [#allocation6], 2048
    $region57: #{action_network_forward.1} parent=1 // pred_fallthru
      _
    %v81 = vld [vmem:[%s0] sm:$0xf]
    %v82 = vld [vmem:[%s2] sm:$0xf]
    %v83 = vld [vmem:[%s2 + $0x4] sm:$0xf]
    %v84 = vld [vmem:[%s2 + $0x8] sm:$0xf]
    %v85 = vld [vmem:[%s2 + $0xc] sm:$0xf]
    %v86 = vld [vmem:[%s1] sm:$0xf]
    %v87 = vld [vmem:[%s3] sm:$0xf]
    %v88 = vld [vmem:[%s3 + $0x4] sm:$0xf]
    %v89 = vld [vmem:[%s3 + $0x8] sm:$0xf]
    %v90 = vld [vmem:[%s3 + $0xc] sm:$0xf]
    %v95 = vunpack.c.l.b16 %v87
    %v96 = vunpack.c.l.b16 %v88
    %v97 = vunpack.c.l.b16 %v89
    %v98 = vunpack.c.l.b16 %v90
    %v99 = vpack.c.b16 %v96, %v95
    %v100 = vpack.c.b16 %v98, %v97
    %vm103 = vcmask 261120
    %v105 = vsel %vm103, %v86, 0
    %107 = vmatprep.subr.bf16.mxu0 0
    %108 = vmatpush1.bf16.msra.mxu0 %v99
    %109 = vmatprep.subr.bf16.mxu0 0
    %110 = vmatpush1.bf16.msra.mxu0 %v100
    %111 = vmatprep.subr.bf16.mxu0 0
    %112 = vmatpush1.bf16.msra.mxu0 0
    %113 = vmatprep.subr.bf16.mxu0 0
    %114 = vmatpush1.bf16.msra.mxu0 0
    %115 = vmatprep.subr.bf16.mxu0 0
    %116 = vmatpush1.bf16.msra.mxu0 0
    %117 = vmatprep.subr.bf16.mxu0 0
    %118 = vmatpush1.bf16.msra.mxu0 0
    %119 = vmatprep.subr.bf16.mxu0 0
    %120 = vmatpush1.bf16.msra.mxu0 0
    %121 = vmatprep.subr.bf16.mxu0 0
    %122 = vmatpush1.bf16.msra.mxu0 0
    %123 = vmatprep.subr.bf16.mxu0 0
    %124 = vmatpush1.bf16.msra.mxu0 0
    %125 = vmatprep.subr.bf16.mxu0 0
    %126 = vmatpush1.bf16.msra.mxu0 0
    %127 = vmatprep.subr.bf16.mxu0 0
    %128 = vmatpush1.bf16.msra.mxu0 0
    %129 = vmatprep.subr.bf16.mxu0 0
    %130 = vmatpush1.bf16.msra.mxu0 0
    %131 = vmatprep.subr.bf16.mxu0 0
    %132 = vmatpush1.bf16.msra.mxu0 0
    %133 = vmatprep.subr.bf16.mxu0 0
    %134 = vmatpush1.bf16.msra.mxu0 0
    %135 = vmatprep.subr.bf16.mxu0 0
    %136 = vmatpush1.bf16.msra.mxu0 0
    %137 = vmatprep.subr.bf16.mxu0 0
    %138 = vmatpush1.bf16.msra.mxu0 0
    %139 = vmatprep.mubr.bf16.mxu0 0
    %140 = vmatmul.mubr.bf16.gmra.mrb[0].mxu0 %v105
    %v141 = vpop.f32.mrb[0].mxu0
    %v142 = vadd.f32 0.0, %v141
    %v143 = vpop.f32.mrb[0].mxu0
    %v144 = vpop.f32.mrb[0].mxu0
    %v145 = vpop.f32.mrb[0].mxu0
    %146 = vdwg.mxu0
    %v151 = vunpack.c.l.b16 %v82
    %v152 = vunpack.c.l.b16 %v83
    %v153 = vunpack.c.l.b16 %v84
    %v154 = vunpack.c.l.b16 %v85
    %v155 = vpack.c.b16 %v152, %v151
    %v156 = vpack.c.b16 %v154, %v153
    %v160 = vsel %vm103, %v81, 0
    %162 = vmatprep.subr.bf16.mxu0 0
    %163 = vmatpush1.bf16.msra.mxu0 %v155
    %164 = vmatprep.subr.bf16.mxu0 0
    %165 = vmatpush1.bf16.msra.mxu0 %v156
    %166 = vmatprep.subr.bf16.mxu0 0
    %167 = vmatpush1.bf16.msra.mxu0 0
    %168 = vmatprep.subr.bf16.mxu0 0
    %169 = vmatpush1.bf16.msra.mxu0 0
    %170 = vmatprep.subr.bf16.mxu0 0
    %171 = vmatpush1.bf16.msra.mxu0 0
    %172 = vmatprep.subr.bf16.mxu0 0
    %173 = vmatpush1.bf16.msra.mxu0 0
    %174 = vmatprep.subr.bf16.mxu0 0
    %175 = vmatpush1.bf16.msra.mxu0 0
    %176 = vmatprep.subr.bf16.mxu0 0
    %177 = vmatpush1.bf16.msra.mxu0 0
    %178 = vmatprep.subr.bf16.mxu0 0
    %179 = vmatpush1.bf16.msra.mxu0 0
    %180 = vmatprep.subr.bf16.mxu0 0
    %181 = vmatpush1.bf16.msra.mxu0 0
    %182 = vmatprep.subr.bf16.mxu0 0
    %183 = vmatpush1.bf16.msra.mxu0 0
    %184 = vmatprep.subr.bf16.mxu0 0
    %185 = vmatpush1.bf16.msra.mxu0 0
    %186 = vmatprep.subr.bf16.mxu0 0
    %187 = vmatpush1.bf16.msra.mxu0 0
    %188 = vmatprep.subr.bf16.mxu0 0
    %189 = vmatpush1.bf16.msra.mxu0 0
    %190 = vmatprep.subr.bf16.mxu0 0
    %191 = vmatpush1.bf16.msra.mxu0 0
    %192 = vmatprep.subr.bf16.mxu0 0
    %193 = vmatpush1.bf16.msra.mxu0 0
    %194 = vmatprep.mubr.bf16.mxu0 0
    %195 = vmatmul.mubr.bf16.gmra.mrb[0].mxu0 %v160
    %v196 = vpop.f32.mrb[0].mxu0
    %v197 = vadd.f32 %v142, %v196
    %v198 = vpop.f32.mrb[0].mxu0
    %v199 = vpop.f32.mrb[0].mxu0
    %v200 = vpop.f32.mrb[0].mxu0
    %201 = vdwg.mxu0
    %v202 = vld [vmem:[%s4] sm:$0x1]
    %v204 = vlaneseq
    %v205 = vshrl.u32 %v204, 7
    %v206 = vsub.s32 0, %v205
    %v207 = vrot.slane %v202, %v206
    %v209 = vadd.f32 %v197, %v207
    %v210 = vmax.f32 %v209, 0.0
    %v211 = vpack.c.bf16 %v210, %v210
    %v212 = vld [vmem:[#allocation2] sm:$0xf]
    %v213 = vld [vmem:[#allocation2 + $0x4] sm:$0xf]
    %v214 = vld [vmem:[#allocation2 + $0x8] sm:$0xf]
    %v215 = vld [vmem:[#allocation2 + $0xc] sm:$0xf]
    %v216 = vld [vmem:[#allocation2 + $0x10] sm:$0xf]
    %v217 = vld [vmem:[#allocation2 + $0x14] sm:$0xf]
    %v218 = vld [vmem:[#allocation2 + $0x18] sm:$0xf]
    %v219 = vld [vmem:[#allocation2 + $0x1c] sm:$0xf]
    %v220 = vld [vmem:[#allocation2 + $0x20] sm:$0xf]
    %v221 = vld [vmem:[#allocation2 + $0x24] sm:$0xf]
    %v222 = vld [vmem:[#allocation2 + $0x28] sm:$0xf]
    %v223 = vld [vmem:[#allocation2 + $0x2c] sm:$0xf]
    %v224 = vld [vmem:[#allocation2 + $0x30] sm:$0xf]
    %v225 = vld [vmem:[#allocation2 + $0x34] sm:$0xf]
    %v226 = vld [vmem:[#allocation2 + $0x38] sm:$0xf]
    %v227 = vld [vmem:[#allocation2 + $0x3c] sm:$0xf]
    %v228 = vld [vmem:[%s6] sm:$0x1]
    %v230 = vlaneseq
    %v231 = vshrl.u32 %v230, 7
    %v232 = vsub.s32 0, %v231
    %v233 = vrot.slane %v228, %v232
    %v251 = vunpack.c.l.b16 %v212
    %v252 = vunpack.c.l.b16 %v213
    %v253 = vunpack.c.l.b16 %v214
    %v254 = vunpack.c.l.b16 %v215
    %v255 = vunpack.c.l.b16 %v216
    %v256 = vunpack.c.l.b16 %v217
    %v257 = vunpack.c.l.b16 %v218
    %v258 = vunpack.c.l.b16 %v219
    %v259 = vunpack.c.l.b16 %v220
    %v260 = vunpack.c.l.b16 %v221
    %v261 = vunpack.c.l.b16 %v222
    %v262 = vunpack.c.l.b16 %v223
    %v263 = vunpack.c.l.b16 %v224
    %v264 = vunpack.c.l.b16 %v225
    %v265 = vunpack.c.l.b16 %v226
    %v266 = vunpack.c.l.b16 %v227
    %v267 = vpack.c.b16 %v252, %v251
    %v268 = vpack.c.b16 %v254, %v253
    %v269 = vpack.c.b16 %v256, %v255
    %v270 = vpack.c.b16 %v258, %v257
    %v271 = vpack.c.b16 %v260, %v259
    %v272 = vpack.c.b16 %v262, %v261
    %v273 = vpack.c.b16 %v264, %v263
    %v274 = vpack.c.b16 %v266, %v265
    %283 = vmatprep.subr.bf16.mxu0 0
    %284 = vmatpush1.bf16.msra.mxu0 %v267
    %285 = vmatprep.subr.bf16.mxu0 0
    %286 = vmatpush1.bf16.msra.mxu0 %v268
    %287 = vmatprep.subr.bf16.mxu0 0
    %288 = vmatpush1.bf16.msra.mxu0 %v269
    %289 = vmatprep.subr.bf16.mxu0 0
    %290 = vmatpush1.bf16.msra.mxu0 %v270
    %291 = vmatprep.subr.bf16.mxu0 0
    %292 = vmatpush1.bf16.msra.mxu0 %v271
    %293 = vmatprep.subr.bf16.mxu0 0
    %294 = vmatpush1.bf16.msra.mxu0 %v272
    %295 = vmatprep.subr.bf16.mxu0 0
    %296 = vmatpush1.bf16.msra.mxu0 %v273
    %297 = vmatprep.subr.bf16.mxu0 0
    %298 = vmatpush1.bf16.msra.mxu0 %v274
    %299 = vmatprep.subr.bf16.mxu0 0
    %300 = vmatpush1.bf16.msra.mxu0 0
    %301 = vmatprep.subr.bf16.mxu0 0
    %302 = vmatpush1.bf16.msra.mxu0 0
    %303 = vmatprep.subr.bf16.mxu0 0
    %304 = vmatpush1.bf16.msra.mxu0 0
    %305 = vmatprep.subr.bf16.mxu0 0
    %306 = vmatpush1.bf16.msra.mxu0 0
    %307 = vmatprep.subr.bf16.mxu0 0
    %308 = vmatpush1.bf16.msra.mxu0 0
    %309 = vmatprep.subr.bf16.mxu0 0
    %310 = vmatpush1.bf16.msra.mxu0 0
    %311 = vmatprep.subr.bf16.mxu0 0
    %312 = vmatpush1.bf16.msra.mxu0 0
    %313 = vmatprep.subr.bf16.mxu0 0
    %314 = vmatpush1.bf16.msra.mxu0 0
    %315 = vmatprep.mubr.bf16.mxu0 0
    %316 = vmatmul.mubr.bf16.gmra.mrb[0].mxu0 %v211
    %v317 = vpop.f32.mrb[0].mxu0
    %v318 = vadd.f32 %v233, %v317
    %v319 = vpop.f32.mrb[0].mxu0
    %v320 = vpop.f32.mrb[0].mxu0
    %v321 = vpop.f32.mrb[0].mxu0
    %322 = vdwg.mxu0
    %v323 = vmax.f32 %v318, 0.0
    %v324 = vpack.c.bf16 %v323, %v323
    %v325 = vld [vmem:[#allocation5] sm:$0xff]
    %v326 = vld [vmem:[#allocation5 + $0x8] sm:$0xff]
    %v327 = vld [vmem:[#allocation5 + $0x10] sm:$0xff]
    %v328 = vld [vmem:[#allocation5 + $0x18] sm:$0xff]
    %v329 = vld [vmem:[#allocation5 + $0x20] sm:$0xff]
    %v330 = vld [vmem:[#allocation5 + $0x28] sm:$0xff]
    %v331 = vld [vmem:[#allocation5 + $0x30] sm:$0xff]
    %v332 = vld [vmem:[#allocation5 + $0x38] sm:$0xff]
    %v333 = vld [vmem:[#allocation5 + $0x40] sm:$0xff]
    %v334 = vld [vmem:[#allocation5 + $0x48] sm:$0xff]
    %v335 = vld [vmem:[#allocation5 + $0x50] sm:$0xff]
    %v336 = vld [vmem:[#allocation5 + $0x58] sm:$0xff]
    %v337 = vld [vmem:[#allocation5 + $0x60] sm:$0xff]
    %v338 = vld [vmem:[#allocation5 + $0x68] sm:$0xff]
    %v339 = vld [vmem:[#allocation5 + $0x70] sm:$0xff]
    %v340 = vld [vmem:[#allocation5 + $0x78] sm:$0xff]
    %v341 = vld [vmem:[%s8] sm:$0x3]
    %v343 = vlaneseq
    %v344 = vshrl.u32 %v343, 7
    %v345 = vsub.s32 0, %v344
    %v346 = vrot.slane %v341, %v345
    %v347 = vlaneseq
    %v348 = vshrl.u32 %v347, 7
    %v349 = vsub.s32 1, %v348
    %v350 = vrot.slane %v341, %v349
    %v369 = vunpack.c.l.b16 %v325
    %v370 = vunpack.c.h.b16 %v325
    %v371 = vunpack.c.l.b16 %v326
    %v372 = vunpack.c.h.b16 %v326
    %v373 = vunpack.c.l.b16 %v327
    %v374 = vunpack.c.h.b16 %v327
    %v375 = vunpack.c.l.b16 %v328
    %v376 = vunpack.c.h.b16 %v328
    %v377 = vunpack.c.l.b16 %v329
    %v378 = vunpack.c.h.b16 %v329
    %v379 = vunpack.c.l.b16 %v330
    %v380 = vunpack.c.h.b16 %v330
    %v381 = vunpack.c.l.b16 %v331
    %v382 = vunpack.c.h.b16 %v331
    %v383 = vunpack.c.l.b16 %v332
    %v384 = vunpack.c.h.b16 %v332
    %v385 = vunpack.c.l.b16 %v333
    %v386 = vunpack.c.h.b16 %v333
    %v387 = vunpack.c.l.b16 %v334
    %v388 = vunpack.c.h.b16 %v334
    %v389 = vunpack.c.l.b16 %v335
    %v390 = vunpack.c.h.b16 %v335
    %v391 = vunpack.c.l.b16 %v336
    %v392 = vunpack.c.h.b16 %v336
    %v393 = vunpack.c.l.b16 %v337
    %v394 = vunpack.c.h.b16 %v337
    %v395 = vunpack.c.l.b16 %v338
    %v396 = vunpack.c.h.b16 %v338
    %v397 = vunpack.c.l.b16 %v339
    %v398 = vunpack.c.h.b16 %v339
    %v399 = vunpack.c.l.b16 %v340
    %v400 = vunpack.c.h.b16 %v340
    %v401 = vpack.c.b16 %v371, %v369
    %v402 = vpack.c.b16 %v372, %v370
    %v403 = vpack.c.b16 %v375, %v373
    %v404 = vpack.c.b16 %v376, %v374
    %v405 = vpack.c.b16 %v379, %v377
    %v406 = vpack.c.b16 %v380, %v378
    %v407 = vpack.c.b16 %v383, %v381
    %v408 = vpack.c.b16 %v384, %v382
    %v409 = vpack.c.b16 %v387, %v385
    %v410 = vpack.c.b16 %v388, %v386
    %v411 = vpack.c.b16 %v391, %v389
    %v412 = vpack.c.b16 %v392, %v390
    %v413 = vpack.c.b16 %v395, %v393
    %v414 = vpack.c.b16 %v396, %v394
    %v415 = vpack.c.b16 %v399, %v397
    %v416 = vpack.c.b16 %v400, %v398
    %433 = vmatprep.subr.bf16.mxu0 %v402
    %434 = vmatpush1.bf16.msra.mxu0 %v401
    %435 = vmatprep.subr.bf16.mxu0 %v404
    %436 = vmatpush1.bf16.msra.mxu0 %v403
    %437 = vmatprep.subr.bf16.mxu0 %v406
    %438 = vmatpush1.bf16.msra.mxu0 %v405
    %439 = vmatprep.subr.bf16.mxu0 %v408
    %440 = vmatpush1.bf16.msra.mxu0 %v407
    %441 = vmatprep.subr.bf16.mxu0 %v410
    %442 = vmatpush1.bf16.msra.mxu0 %v409
    %443 = vmatprep.subr.bf16.mxu0 %v412
    %444 = vmatpush1.bf16.msra.mxu0 %v411
    %445 = vmatprep.subr.bf16.mxu0 %v414
    %446 = vmatpush1.bf16.msra.mxu0 %v413
    %447 = vmatprep.subr.bf16.mxu0 %v416
    %448 = vmatpush1.bf16.msra.mxu0 %v415
    %449 = vmatprep.subr.bf16.mxu0 0
    %450 = vmatpush1.bf16.msra.mxu0 0
    %451 = vmatprep.subr.bf16.mxu0 0
    %452 = vmatpush1.bf16.msra.mxu0 0
    %453 = vmatprep.subr.bf16.mxu0 0
    %454 = vmatpush1.bf16.msra.mxu0 0
    %455 = vmatprep.subr.bf16.mxu0 0
    %456 = vmatpush1.bf16.msra.mxu0 0
    %457 = vmatprep.subr.bf16.mxu0 0
    %458 = vmatpush1.bf16.msra.mxu0 0
    %459 = vmatprep.subr.bf16.mxu0 0
    %460 = vmatpush1.bf16.msra.mxu0 0
    %461 = vmatprep.subr.bf16.mxu0 0
    %462 = vmatpush1.bf16.msra.mxu0 0
    %463 = vmatprep.subr.bf16.mxu0 0
    %464 = vmatpush1.bf16.msra.mxu0 0
    %465 = vmatprep.mubr.bf16.mxu0 0
    %466 = vmatmul.mubr.bf16.gmra.mrb[0].mxu0 %v324
    %v467 = vpop.f32.mrb[0].mxu0
    %v468 = vadd.f32 %v346, %v467
    %v469 = vpop.f32.mrb[0].mxu0
    %v470 = vadd.f32 %v350, %v469
    %v471 = vpop.f32.mrb[0].mxu0
    %v472 = vpop.f32.mrb[0].mxu0
    %473 = vdwg.mxu0
    %v474 = vmax.f32 %v468, 0.0
    %v475 = vmax.f32 %v470, 0.0
    %v476 = vpack.c.bf16 %v474, %v474
    %v477 = vpack.c.bf16 %v475, %v475
    %v478 = vld [vmem:[#allocation7] sm:$0xf]
    %v479 = vld [vmem:[#allocation7 + $0x4] sm:$0xf]
    %v480 = vld [vmem:[#allocation7 + $0x8] sm:$0xf]
    %v481 = vld [vmem:[#allocation7 + $0xc] sm:$0xf]
    %v482 = vld [vmem:[#allocation7 + $0x10] sm:$0xf]
    %v483 = vld [vmem:[#allocation7 + $0x14] sm:$0xf]
    %v484 = vld [vmem:[#allocation7 + $0x18] sm:$0xf]
    %v485 = vld [vmem:[#allocation7 + $0x1c] sm:$0xf]
    %v486 = vld [vmem:[#allocation7 + $0x20] sm:$0xf]
    %v487 = vld [vmem:[#allocation7 + $0x24] sm:$0xf]
    %v488 = vld [vmem:[#allocation7 + $0x28] sm:$0xf]
    %v489 = vld [vmem:[#allocation7 + $0x2c] sm:$0xf]
    %v490 = vld [vmem:[#allocation7 + $0x30] sm:$0xf]
    %v491 = vld [vmem:[#allocation7 + $0x34] sm:$0xf]
    %v492 = vld [vmem:[#allocation7 + $0x38] sm:$0xf]
    %v493 = vld [vmem:[#allocation7 + $0x3c] sm:$0xf]
    %v494 = vld [vmem:[#allocation7 + $0x40] sm:$0xf]
    %v495 = vld [vmem:[#allocation7 + $0x44] sm:$0xf]
    %v496 = vld [vmem:[#allocation7 + $0x48] sm:$0xf]
    %v497 = vld [vmem:[#allocation7 + $0x4c] sm:$0xf]
    %v498 = vld [vmem:[#allocation7 + $0x50] sm:$0xf]
    %v499 = vld [vmem:[#allocation7 + $0x54] sm:$0xf]
    %v500 = vld [vmem:[#allocation7 + $0x58] sm:$0xf]
    %v501 = vld [vmem:[#allocation7 + $0x5c] sm:$0xf]
    %v502 = vld [vmem:[#allocation7 + $0x60] sm:$0xf]
    %v503 = vld [vmem:[#allocation7 + $0x64] sm:$0xf]
    %v504 = vld [vmem:[#allocation7 + $0x68] sm:$0xf]
    %v505 = vld [vmem:[#allocation7 + $0x6c] sm:$0xf]
    %v506 = vld [vmem:[#allocation7 + $0x70] sm:$0xf]
    %v507 = vld [vmem:[#allocation7 + $0x74] sm:$0xf]
    %v508 = vld [vmem:[#allocation7 + $0x78] sm:$0xf]
    %v509 = vld [vmem:[#allocation7 + $0x7c] sm:$0xf]
    %v510 = vld [vmem:[%s10] sm:$0x1]
    %v512 = vlaneseq
    %v513 = vshrl.u32 %v512, 7
    %v514 = vsub.s32 0, %v513
    %v515 = vrot.slane %v510, %v514
    %v549 = vunpack.c.l.b16 %v478
    %v550 = vunpack.c.l.b16 %v479
    %v551 = vunpack.c.l.b16 %v480
    %v552 = vunpack.c.l.b16 %v481
    %v553 = vunpack.c.l.b16 %v482
    %v554 = vunpack.c.l.b16 %v483
    %v555 = vunpack.c.l.b16 %v484
    %v556 = vunpack.c.l.b16 %v485
    %v557 = vunpack.c.l.b16 %v486
    %v558 = vunpack.c.l.b16 %v487
    %v559 = vunpack.c.l.b16 %v488
    %v560 = vunpack.c.l.b16 %v489
    %v561 = vunpack.c.l.b16 %v490
    %v562 = vunpack.c.l.b16 %v491
    %v563 = vunpack.c.l.b16 %v492
    %v564 = vunpack.c.l.b16 %v493
    %v565 = vunpack.c.l.b16 %v494
    %v566 = vunpack.c.l.b16 %v495
    %v567 = vunpack.c.l.b16 %v496
    %v568 = vunpack.c.l.b16 %v497
    %v569 = vunpack.c.l.b16 %v498
    %v570 = vunpack.c.l.b16 %v499
    %v571 = vunpack.c.l.b16 %v500
    %v572 = vunpack.c.l.b16 %v501
    %v573 = vunpack.c.l.b16 %v502
    %v574 = vunpack.c.l.b16 %v503
    %v575 = vunpack.c.l.b16 %v504
    %v576 = vunpack.c.l.b16 %v505
    %v577 = vunpack.c.l.b16 %v506
    %v578 = vunpack.c.l.b16 %v507
    %v579 = vunpack.c.l.b16 %v508
    %v580 = vunpack.c.l.b16 %v509
    %v581 = vpack.c.b16 %v550, %v549
    %v582 = vpack.c.b16 %v552, %v551
    %v583 = vpack.c.b16 %v554, %v553
    %v584 = vpack.c.b16 %v556, %v555
    %v585 = vpack.c.b16 %v558, %v557
    %v586 = vpack.c.b16 %v560, %v559
    %v587 = vpack.c.b16 %v562, %v561
    %v588 = vpack.c.b16 %v564, %v563
    %v589 = vpack.c.b16 %v566, %v565
    %v590 = vpack.c.b16 %v568, %v567
    %v591 = vpack.c.b16 %v570, %v569
    %v592 = vpack.c.b16 %v572, %v571
    %v593 = vpack.c.b16 %v574, %v573
    %v594 = vpack.c.b16 %v576, %v575
    %v595 = vpack.c.b16 %v578, %v577
    %v596 = vpack.c.b16 %v580, %v579
    %613 = vmatprep.subr.bf16.mxu0 0
    %614 = vmatpush1.bf16.msra.mxu0 %v581
    %615 = vmatprep.subr.bf16.mxu0 0
    %616 = vmatpush1.bf16.msra.mxu0 %v582
    %617 = vmatprep.subr.bf16.mxu0 0
    %618 = vmatpush1.bf16.msra.mxu0 %v583
    %619 = vmatprep.subr.bf16.mxu0 0
    %620 = vmatpush1.bf16.msra.mxu0 %v584
    %621 = vmatprep.subr.bf16.mxu0 0
    %622 = vmatpush1.bf16.msra.mxu0 %v585
    %623 = vmatprep.subr.bf16.mxu0 0
    %624 = vmatpush1.bf16.msra.mxu0 %v586
    %625 = vmatprep.subr.bf16.mxu0 0
    %626 = vmatpush1.bf16.msra.mxu0 %v587
    %627 = vmatprep.subr.bf16.mxu0 0
    %628 = vmatpush1.bf16.msra.mxu0 %v588
    %629 = vmatprep.subr.bf16.mxu0 0
    %630 = vmatpush1.bf16.msra.mxu0 %v589
    %631 = vmatprep.subr.bf16.mxu0 0
    %632 = vmatpush1.bf16.msra.mxu0 %v590
    %633 = vmatprep.subr.bf16.mxu0 0
    %634 = vmatpush1.bf16.msra.mxu0 %v591
    %635 = vmatprep.subr.bf16.mxu0 0
    %636 = vmatpush1.bf16.msra.mxu0 %v592
    %637 = vmatprep.subr.bf16.mxu0 0
    %638 = vmatpush1.bf16.msra.mxu0 %v593
    %639 = vmatprep.subr.bf16.mxu0 0
    %640 = vmatpush1.bf16.msra.mxu0 %v594
    %641 = vmatprep.subr.bf16.mxu0 0
    %642 = vmatpush1.bf16.msra.mxu0 %v595
    %643 = vmatprep.subr.bf16.mxu0 0
    %644 = vmatpush1.bf16.msra.mxu0 %v596
    %645 = vmatprep.mubr.bf16.mxu0 %v477
    %646 = vmatmul.mubr.bf16.gmra.mrb[0].mxu0 %v476
    %v647 = vpop.f32.mrb[0].mxu0
    %v648 = vadd.f32 %v515, %v647
    %v649 = vpop.f32.mrb[0].mxu0
    %v650 = vpop.f32.mrb[0].mxu0
    %v651 = vpop.f32.mrb[0].mxu0
    %652 = vdwg.mxu0
    %653 = vst [vmem:[#allocation8] sm:$0xff] %v648
    // Predicated region
    $region58: #{action_network_forward.1} parent=1 // pred_check
      _
    $region59: #{action_network_forward.1} parent=1 // pred_check_branch
      %655 = sbr.rel (0) target = $region61
    $region60: #{action_network_forward.1} parent=1 // pred_region
      %s657 = ssub.s32 128, 128
      %658 = vsyncadd [#allocation4], %s657
      %s660 = sshll.u32 [#allocation8], 4
      %s661 = int_to_ptr.vmem [resolvable:$true] %s660
      %663 = dma.vmem_to_hbm [thread:$0]  %s661, 128, %s11, [#allocation4]
    $region61: #{action_network_forward.1} parent=1 // pred_fallthru
      _
    // Predicated region
    $region62: #{action_network_forward.1} parent=1 // pred_check
      _
    $region63: #{action_network_forward.1} parent=1 // pred_check_branch
      %665 = sbr.rel (0) target = $region65
    $region64: #{action_network_forward.1} parent=1 // pred_region
      %666 = dma.done [#allocation4], 128
    $region65: #{action_network_forward.1} parent=1 // pred_fallthru
      _
    %667 = vsyncpa [#allocation3], 1
    %668 = vsyncpa [#allocation6], 1
    %669 = vsyncpa [#allocation4], 1

</llo_original>
